<compile_context>
chip_gen: v5e
topology: v5e:2x2
jax: 0.10.0
libtpu: 0.0.40
codegen_flags: <defaults>
</compile_context>

<pallas_src>
import functools

import jax
import jax.numpy as jnp
from jax import lax
from jax.experimental import pallas as pl
from jax.experimental.pallas import tpu as pltpu


# ----------------------------------------------------------------------------
# Kernels
# ----------------------------------------------------------------------------
def _dora_norm_kernel(w0_ref, a_ref, b_ref, scale_ref, s_ref, *, eps):
    """Pre-pass: s = dora_scale * rsqrt(||W0 + (alpha/rank)*B@A||_col^2).

    Grid = (in_tiles, out_tiles); the out axis (axis 1) is the reduction.
    The partial column-norm sums accumulate directly in the f32 output block
    (its index depends only on the in-tile, so it stays VMEM-resident).
    A already carries the alpha/rank factor (folded in the wrapper).
    """
    ko = pl.program_id(1)

    @pl.when(ko == 0)
    def _():
        s_ref[...] = jnp.zeros_like(s_ref)

    delta = jnp.dot(b_ref[...], a_ref[...], preferred_element_type=jnp.float32)
    wp = w0_ref[...].astype(jnp.float32) + delta              # (To, Tk) f32
    s_ref[...] += jnp.sum(wp * wp, axis=0, keepdims=True)     # (1, Tk)

    @pl.when(ko == pl.num_programs(1) - 1)
    def _():
        colnorm2 = s_ref[...]
        scale = scale_ref[...].astype(jnp.float32)
        if eps:
            s_ref[...] = scale / (jnp.sqrt(colnorm2) + eps)    # norm_epsilon path
        else:
            s_ref[...] = scale * lax.rsqrt(colnorm2)           # EUP rsqrt


def _dora_matmul_kernel(x_ref, s_ref, w0_ref, a_ref, b_ref, bias_ref, o_ref,
                        *scratch, mxu_dtype, acc_in_out):
    """Main pass: y = (x*s) @ W0^T + ((x*s) @ A_s^T) @ B^T + bias.

    Grid = (batch_tiles, out_tiles, in_tiles); in (axis 2) is the reduction.
    A_s == (alpha/rank)*A (pre-scaled in the wrapper).  WP is never formed.
    """
    if acc_in_out:
        (lora_ref,) = scratch          # f32 output doubles as the accumulator
        acc_ref = o_ref
    else:
        acc_ref, lora_ref = scratch

    k = pl.program_id(2)

    @pl.when(k == 0)
    def _():
        acc_ref[...] = jnp.zeros_like(acc_ref)
        lora_ref[...] = jnp.zeros_like(lora_ref)

    # Fold the per-in-column DoRA factor into x (exact) and feed the MXU.
    x_s = (x_ref[...].astype(jnp.float32) * s_ref[...]).astype(mxu_dtype)

    # Base contribution: (Tb, Tk) x (To, Tk) contracting the in axis — no
    # explicit transpose (no XLU work, no (To, Tk) temporary beyond the tile).
    acc_ref[...] += lax.dot_general(
        x_s, w0_ref[...].astype(mxu_dtype),
        dimension_numbers=(((1,), (1,)), ((), ())),
        preferred_element_type=jnp.float32)

    # Skinny LoRA accumulator: (Tb, Tk) x (rank, Tk) -> (Tb, rank).
    lora_ref[...] += lax.dot_general(
        x_s, a_ref[...],
        dimension_numbers=(((1,), (1,)), ((), ())),
        preferred_element_type=jnp.float32)

    @pl.when(k == pl.num_programs(2) - 1)
    def _():
        # (Tb, rank) x (To, rank) -> (Tb, To); rank is tiny so this is cheap
        # and only happens once per (batch, out) tile.
        lora_out = lax.dot_general(
            lora_ref[...].astype(mxu_dtype), b_ref[...],
            dimension_numbers=(((1,), (1,)), ((), ())),
            preferred_element_type=jnp.float32)
        o_ref[...] = (acc_ref[...] + lora_out
                      + bias_ref[...]).astype(o_ref.dtype)


# ----------------------------------------------------------------------------
# Tile selection helpers (VMEM-aware)
# ----------------------------------------------------------------------------
def _itemsize(dt):
    return jnp.dtype(dt).itemsize


def _pad(n, m):
    return ((n + m - 1) // m) * m


def _sublane_pack(dtype):
    # f32 -> 8, bf16 -> 16, int8/fp8 -> 32 rows per packed sublane group.
    return (4 // _itemsize(dtype)) * 8


def _vmem_capacity_bytes():
    try:
        return int(pltpu.get_tpu_info().vmem_capacity_bytes)
    except Exception:
        return 64 << 20  # conservative fallback (v7x per-core physical VMEM)


def _pick_tile(dim, candidates):
    for c in candidates:
        if c <= dim and dim % c == 0:
            return c
    return dim  # full dimension is always a legal block


def _shrink(dim, cur, candidates):
    for c in candidates:
        if c < cur and c <= dim and dim % c == 0:
            return c
    return None


def _main_step_vmem(tb, to, tk, rank, x_dt, w_dt, p_dt, o_dt, acc_in_out):
    b = 0
    b += 2 * tb * tk * _itemsize(x_dt)                      # x (double-buffered)
    b += 2 * _pad(1, 8) * tk * 4                            # s row (f32)
    b += 2 * to * tk * _itemsize(w_dt)                      # W0
    b += 2 * _pad(rank, 8) * tk * _itemsize(p_dt)           # A (alpha-scaled)
    b += 2 * to * _pad(rank, 128) * _itemsize(p_dt)         # B (lane-padded)
    b += 2 * _pad(1, 8) * to * 4                            # bias row
    b += 2 * tb * to * _itemsize(o_dt)                      # output
    b += tb * _pad(rank, 128) * 4                           # lora accumulator
    if not acc_in_out:
        b += tb * to * 4                                    # f32 accumulator
    b += tb * tk * 4 + tb * to * 4                          # in-kernel f32 temps
    return int(b * 1.15)


def _norm_step_vmem(to, tk, rank, w_dt, p_dt):
    b = 0
    b += 2 * to * tk * _itemsize(w_dt)                      # W0
    b += 2 * _pad(rank, 8) * tk * _itemsize(p_dt)           # A
    b += 2 * to * _pad(rank, 128) * _itemsize(p_dt)         # B
    b += 2 * _pad(1, 8) * tk * 4 * 2                        # dora_scale + s out
    b += 2 * to * tk * 4                                    # f32 delta/wp temps
    return int(b * 1.15)


# ----------------------------------------------------------------------------
# Wrapper
# ----------------------------------------------------------------------------
def dora_linear(x, w0, lora_a, lora_b, dora_scale, bias=None, *, alpha, rank,
                norm_epsilon=False, block_batch=None, block_out=None,
                block_in=None, mxu_dtype=None):
    """DoRA forward for an nn.Linear base layer (decompose_output_axis=False).

    NOTE on mxu_dtype: it defaults to x.dtype for bit-exactness, but for
    float32 inputs pass mxu_dtype=jnp.bfloat16 — the MXU runs 2-4x faster on
    bf16 operands on v5e/v6e/v7x and accumulation stays in f32.
    """
    batch, in_features = x.shape
    out_features, in_w = w0.shape
    assert in_w == in_features
    assert lora_a.shape == (rank, in_features)
    assert lora_b.shape == (out_features, rank)

    if mxu_dtype is None:
        mxu_dtype = x.dtype
    out_dtype = x.dtype
    acc_in_out = jnp.dtype(out_dtype) == jnp.dtype(jnp.float32)
    eps = float(jnp.finfo(jnp.float32).eps) if norm_epsilon else 0.0
    alpha_over_rank = float(alpha) / float(rank)

    # Fold alpha/rank into A once (removes a per-step VPU scale over (To,Tk)
    # in the pre-pass and the per-tile scale in the main kernel).
    a_scaled = (lora_a.astype(jnp.float32) * alpha_over_rank).astype(mxu_dtype)
    b_mxu = lora_b.astype(mxu_dtype)
    # Pre-cast W0 when the MXU dtype is narrower: halves the dominant HBM
    # stream (W0 is read by both kernels and once per batch tile in the main).
    w0_in = w0.astype(mxu_dtype) if _itemsize(mxu_dtype) < _itemsize(w0.dtype) else w0

    dora_scale = jnp.reshape(dora_scale, (1, in_features)).astype(jnp.float32)
    if bias is None:
        bias = jnp.zeros((1, out_features), dtype=jnp.float32)
    bias = jnp.reshape(bias, (1, out_features)).astype(jnp.float32)

    # ---- tile selection -----------------------------------------------------
    cap = _vmem_capacity_bytes()
    budget = int(cap * 0.75)
    vmem_limit = int(cap * 0.9)

    sub = _sublane_pack(x.dtype)
    tb_cands = tuple(c for c in (512, 256, 128, 64, 32, 16, 8) if c % sub == 0)
    to_cands = (1024, 512, 256, 128)
    tk_cands = (512, 384, 256, 128)

    auto_b, auto_o, auto_k = block_batch is None, block_out is None, block_in is None
    if auto_b:
        block_batch = _pick_tile(batch, tb_cands)
    if auto_o:
        block_out = _pick_tile(out_features, to_cands)
    if auto_k:
        block_in = _pick_tile(in_features, tk_cands)

    # Correctness guard: user-supplied blocks must divide the dimension.
    for name, dim, blk in (("block_batch", batch, block_batch),
                           ("block_out", out_features, block_out),
                           ("block_in", in_features, block_in)):
        if dim % blk != 0:
            raise ValueError(f"{name}={blk} does not divide dimension {dim}")

    def _fits():
        m = _main_step_vmem(block_batch, block_out, block_in, rank,
                            x.dtype, w0_in.dtype, mxu_dtype, out_dtype,
                            acc_in_out)
        n = _norm_step_vmem(block_out, block_in, rank, w0_in.dtype, mxu_dtype)
        return max(m, n) <= budget

    # Shrink auto-picked tiles (in, then out, then batch) until we fit VMEM.
    while not _fits():
        if auto_k:
            nk = _shrink(in_features, block_in, tk_cands)
            if nk is not None:
                block_in = nk
                continue
        if auto_o:
            no = _shrink(out_features, block_out, to_cands)
            if no is not None:
                block_out = no
                continue
        if auto_b:
            nb = _shrink(batch, block_batch, tb_cands)
            if nb is not None:
                block_batch = nb
                continue
        break

    # ---- pass 1: per-in-column factor s ------------------------------------
    norm_grid = (in_features // block_in, out_features // block_out)
    s = pl.pallas_call(
        functools.partial(_dora_norm_kernel, eps=eps),
        out_shape=jax.ShapeDtypeStruct((1, in_features), jnp.float32),
        grid_spec=pltpu.PrefetchScalarGridSpec(
            num_scalar_prefetch=0,
            grid=norm_grid,
            in_specs=[
                pl.BlockSpec((block_out, block_in), lambda ki, ko: (ko, ki)),  # W0
                pl.BlockSpec((rank, block_in), lambda ki, ko: (0, ki)),        # A*alpha/r
                pl.BlockSpec((block_out, rank), lambda ki, ko: (ko, 0)),       # B
                pl.BlockSpec((1, block_in), lambda ki, ko: (0, ki)),           # dora_scale
            ],
            out_specs=pl.BlockSpec((1, block_in), lambda ki, ko: (0, ki)),
        ),
        compiler_params=pltpu.CompilerParams(
            dimension_semantics=("parallel", "arbitrary"),
            vmem_limit_bytes=vmem_limit),
    )(w0_in, a_scaled, b_mxu, dora_scale)

    # ---- pass 2: y = (x*s) @ W0^T + ((x*s) @ A_s^T) @ B^T + bias ------------
    grid = (batch // block_batch, out_features // block_out,
            in_features // block_in)

    scratch_shapes = []
    if not acc_in_out:
        scratch_shapes.append(pltpu.VMEM((block_batch, block_out), jnp.float32))
    scratch_shapes.append(pltpu.VMEM((block_batch, rank), jnp.float32))

    kernel = functools.partial(_dora_matmul_kernel,
                               mxu_dtype=mxu_dtype, acc_in_out=acc_in_out)

    return pl.pallas_call(
        kernel,
        out_shape=jax.ShapeDtypeStruct((batch, out_features), out_dtype),
        grid_spec=pltpu.PrefetchScalarGridSpec(
            num_scalar_prefetch=0,
            grid=grid,
            in_specs=[
                pl.BlockSpec((block_batch, block_in), lambda i, j, k: (i, k)),   # x
                pl.BlockSpec((1, block_in), lambda i, j, k: (0, k)),             # s
                pl.BlockSpec((block_out, block_in), lambda i, j, k: (j, k)),     # W0
                pl.BlockSpec((rank, block_in), lambda i, j, k: (0, k)),          # A*alpha/r
                pl.BlockSpec((block_out, rank), lambda i, j, k: (j, 0)),         # B
                pl.BlockSpec((1, block_out), lambda i, j, k: (0, j)),            # bias
            ],
            out_specs=pl.BlockSpec((block_batch, block_out),
                                   lambda i, j, k: (i, j)),
            scratch_shapes=scratch_shapes,
        ),
        compiler_params=pltpu.CompilerParams(
            dimension_semantics=("parallel", "parallel", "arbitrary"),
            vmem_limit_bytes=vmem_limit),
    )(x, s, w0_in, a_scaled, b_mxu, bias)


# ----------------------------------------------------------------------------
# Pure-JAX reference (mirrors DoRAModule.forward for nn.Linear)
# ----------------------------------------------------------------------------
def dora_linear_ref(x, w0, lora_a, lora_b, dora_scale, bias, *, alpha, rank,
                    norm_epsilon=False):
    eps = float(jnp.finfo(jnp.float32).eps) if norm_epsilon else 0.0
    wp = w0 + (lora_b @ lora_a) * (alpha / rank)
    norm = jnp.linalg.norm(wp, axis=0, keepdims=True) + eps
    wp = dora_scale * (wp / norm)
    return x @ wp.T + bias


if __name__ == "__main__":
    key = jax.random.PRNGKey(0)
    batch, in_features, out_features, rank = 16, 256, 256, 8
    alpha = 4.0

    k_x, k_w0, k_a, k_b, k_bias = jax.random.split(key, 5)
    x = jax.random.normal(k_x, (batch, in_features), jnp.float32)
    w0 = jax.random.normal(k_w0, (out_features, in_features), jnp.float32) * 0.1
    # lora_down (kaiming-uniform in torch) — deterministic stand-in.
    lora_a = jax.random.uniform(k_a, (rank, in_features), jnp.float32,
                                minval=-0.3, maxval=0.3)
    # lora_up is zero-init in torch; use nonzero values so the LoRA branch
    # actually contributes to what is being tested.
    lora_b = jax.random.normal(k_b, (out_features, rank), jnp.float32) * 0.05
    bias = jax.random.normal(k_bias, (1, out_features), jnp.float32) * 0.1
    # dora_scale from __init__: norm of W0 over the output axis -> (1, in).
    dora_scale = jnp.linalg.norm(w0, axis=0, keepdims=True)

    ref = dora_linear_ref(x, w0, lora_a, lora_b, dora_scale, bias,
                          alpha=alpha, rank=rank)

    # (1) f32 path, blocks chosen to exercise a (2, 2, 2) grid (both parallel
    #     axes and the reduction axis) plus a (2, 2) pre-pass grid.
    out = dora_linear(x, w0, lora_a, lora_b, dora_scale, bias,
                      alpha=alpha, rank=rank,
                      block_batch=8, block_out=128, block_in=128)
    out = jax.block_until_ready(out)
    assert out.shape == (batch, out_features)
    assert jnp.allclose(out, ref, atol=1e-3, rtol=1e-3), "f32 mismatch vs reference"

    # (2) bf16 MXU operands for f32 inputs (recommended fast path on TPU).
    out_bf = dora_linear(x, w0, lora_a, lora_b, dora_scale, bias,
                         alpha=alpha, rank=rank, mxu_dtype=jnp.bfloat16)
    out_bf = jax.block_until_ready(out_bf)
    assert jnp.allclose(out_bf, ref, atol=5e-2, rtol=5e-2), "bf16-MXU mismatch"

    # (3) bf16 inputs / bf16 output (exercises the f32 scratch-accumulator
    #     path and the bf16 sublane-pack tile selection).
    out_b16 = dora_linear(x.astype(jnp.bfloat16), w0.astype(jnp.bfloat16),
                          lora_a.astype(jnp.bfloat16),
                          lora_b.astype(jnp.bfloat16),
                          dora_scale.astype(jnp.bfloat16),
                          bias.astype(jnp.bfloat16),
                          alpha=alpha, rank=rank)
    out_b16 = jax.block_until_ready(out_b16)
    assert jnp.allclose(out_b16.astype(jnp.float32), ref,
                        atol=1e-1, rtol=1e-1), "bf16 mismatch"

    # TODO(synk): Conv2d base-layer variant (make_weight reshape + F.conv2d)
    # and the decompose_output_axis=True norm variant are not implemented;
    # only the Linear / decompose-input-axis path is covered here.
    print("KERNEL_OK")
</pallas_src>

<mosaic_0001>
module attributes {stable_mosaic.version = 11 : i64} {
  func.func @_dora_norm_kernel(%arg0: i32, %arg1: i32, %arg2: memref<128x128xf32, #tpu.memory_space<vmem>>, %arg3: memref<8x128xf32, #tpu.memory_space<vmem>>, %arg4: memref<128x8xf32, #tpu.memory_space<vmem>>, %arg5: memref<1x128xf32, #tpu.memory_space<vmem>>, %arg6: memref<1x128xf32, #tpu.memory_space<vmem>>) attributes {dimension_semantics = [#tpu.dimension_semantics<parallel>, #tpu.dimension_semantics<arbitrary>], iteration_bounds = array<i64: 2, 2>, scalar_prefetch = 0 : i64, scratch_operands = 0 : i64, tpu.core_type = #tpu.core_type<tc>, window_params = [{transform_indices = @transform_0, window_bounds = array<i64: 128, 128>}, {transform_indices = @transform_1, window_bounds = array<i64: 8, 128>}, {transform_indices = @transform_2, window_bounds = array<i64: 128, 8>}, {transform_indices = @transform_3, window_bounds = array<i64: 1, 128>}, {transform_indices = @transform_4, window_bounds = array<i64: 1, 128>}]} {
    %c0_i32 = arith.constant 0 : i32
    %0 = arith.cmpi eq, %arg1, %c0_i32 : i32
    %1 = arith.extui %0 : i1 to i32
    %c0_i32_0 = arith.constant 0 : i32
    %2 = arith.cmpi ne, %1, %c0_i32_0 : i32
    scf.if %2 {
      %cst_12 = arith.constant 0.000000e+00 : f32
      %17 = vector.broadcast %cst_12 : f32 to vector<1x128xf32>
      %c0_13 = arith.constant 0 : index
      %c0_14 = arith.constant 0 : index
      %18 = vector.load %arg6[%c0_13, %c0_14] : memref<1x128xf32, #tpu.memory_space<vmem>>, vector<1x128xf32>
      tpu.vector_store %arg6[%c0_13, %c0_14], %17 {strides = array<i32>} : memref<1x128xf32, #tpu.memory_space<vmem>>, vector<1x128xf32>,
    } else {
    }
    %c0 = arith.constant 0 : index
    %c0_1 = arith.constant 0 : index
    %3 = vector.load %arg4[%c0, %c0_1] : memref<128x8xf32, #tpu.memory_space<vmem>>, vector<128x8xf32>
    %c0_2 = arith.constant 0 : index
    %c0_3 = arith.constant 0 : index
    %4 = vector.load %arg3[%c0_2, %c0_3] : memref<8x128xf32, #tpu.memory_space<vmem>>, vector<8x128xf32>
    %cst = arith.constant dense<0.000000e+00> : vector<128x128xf32>
    %5 = tpu.matmul %3, %4, %cst {dimension_numbers = #tpu.dot_dimension_numbers<[1], [0], [0], [1], [0, 0, 1, 1], [], []>} : vector<128x8xf32>, vector<8x128xf32>, vector<128x128xf32> -> vector<128x128xf32>
    %c0_4 = arith.constant 0 : index
    %c0_5 = arith.constant 0 : index
    %6 = vector.load %arg2[%c0_4, %c0_5] : memref<128x128xf32, #tpu.memory_space<vmem>>, vector<128x128xf32>
    %7 = arith.addf %6, %5 : vector<128x128xf32>
    %c0_6 = arith.constant 0 : index
    %c0_7 = arith.constant 0 : index
    %8 = vector.load %arg6[%c0_6, %c0_7] : memref<1x128xf32, #tpu.memory_space<vmem>>, vector<1x128xf32>
    %9 = arith.mulf %7, %7 : vector<128x128xf32>
    %cst_8 = arith.constant dense<0.000000e+00> : vector<128xf32>
    %10 = vector.multi_reduction <add>, %9, %cst_8 [0] : vector<128x128xf32> to vector<128xf32>
    %11 = vector.shape_cast %10 : vector<128xf32> to vector<1x128xf32>
    %12 = arith.addf %8, %11 : vector<1x128xf32>
    %c0_9 = arith.constant 0 : index
    %c0_10 = arith.constant 0 : index
    %13 = vector.load %arg6[%c0_9, %c0_10] : memref<1x128xf32, #tpu.memory_space<vmem>>, vector<1x128xf32>
    tpu.vector_store %arg6[%c0_9, %c0_10], %12 {strides = array<i32>} : memref<1x128xf32, #tpu.memory_space<vmem>>, vector<1x128xf32>,
    %c1_i32 = arith.constant 1 : i32
    %14 = arith.cmpi eq, %arg1, %c1_i32 : i32
    %15 = arith.extui %14 : i1 to i32
    %c0_i32_11 = arith.constant 0 : i32
    %16 = arith.cmpi ne, %15, %c0_i32_11 : i32
    scf.if %16 {
      %c0_12 = arith.constant 0 : index
      %c0_13 = arith.constant 0 : index
      %17 = vector.load %arg6[%c0_12, %c0_13] : memref<1x128xf32, #tpu.memory_space<vmem>>, vector<1x128xf32>
      %c0_14 = arith.constant 0 : index
      %c0_15 = arith.constant 0 : index
      %18 = vector.load %arg5[%c0_14, %c0_15] : memref<1x128xf32, #tpu.memory_space<vmem>>, vector<1x128xf32>
      %19 = math.rsqrt %17 : vector<1x128xf32>
      %20 = arith.mulf %18, %19 : vector<1x128xf32>
      %c0_16 = arith.constant 0 : index
      %c0_17 = arith.constant 0 : index
      %21 = vector.load %arg6[%c0_16, %c0_17] : memref<1x128xf32, #tpu.memory_space<vmem>>, vector<1x128xf32>
      tpu.vector_store %arg6[%c0_16, %c0_17], %20 {strides = array<i32>} : memref<1x128xf32, #tpu.memory_space<vmem>>, vector<1x128xf32>,
    } else {
    }
    return
  }
  func.func @transform_0(%arg0: i32, %arg1: i32) -> (i32, i32) {
    %c0_i32 = arith.constant 0 : i32
    return %arg1, %arg0 : i32, i32
  }
  func.func @transform_1(%arg0: i32, %arg1: i32) -> (i32, i32) {
    %c0_i32 = arith.constant 0 : i32
    %c0_i32_0 = arith.constant 0 : i32
    return %c0_i32, %arg0 : i32, i32
  }
  func.func @transform_2(%arg0: i32, %arg1: i32) -> (i32, i32) {
    %c0_i32 = arith.constant 0 : i32
    %c0_i32_0 = arith.constant 0 : i32
    return %arg1, %c0_i32 : i32, i32
  }
  func.func @transform_3(%arg0: i32, %arg1: i32) -> (i32, i32) {
    %c0_i32 = arith.constant 0 : i32
    %c0_i32_0 = arith.constant 0 : i32
    return %c0_i32, %arg0 : i32, i32
  }
  func.func @transform_4(%arg0: i32, %arg1: i32) -> (i32, i32) {
    %c0_i32 = arith.constant 0 : i32
    %c0_i32_0 = arith.constant 0 : i32
    return %c0_i32, %arg0 : i32, i32
  }
}

</mosaic_0001>

<llo_original>
// kernel: tpu_custom_call.1
$region0: #{tpu_custom_call.1}
  #allocation0 [shape = 'u32[]', space=smem, size = 0x4, offset = 0x4, fixed_abs, tag = 'smem constant byte address 0x4 - core index']
  #allocation1 [shape = 'u32[72,128]{1,0:T(1,128)}', space=vmem, size = 0x9000, scoped, tag = 'internal scratch']
  %s0 = inlined_call_operand.hbm [shape: f32[256,256], index: 0, kind: input, shape index: {}]
  %s1 = inlined_call_operand.vmem [shape: f32[8,256], index: 1, kind: input, shape index: {}]
  %s2 = inlined_call_operand.vmem [shape: f32[256,8], index: 2, kind: input, shape index: {}]
  %s3 = inlined_call_operand.vmem [shape: f32[1,256], index: 3, kind: input, shape index: {}]
  %s4 = inlined_call_operand.hbm [shape: f32[1,256], index: 4, kind: output, shape index: {}]
  %s5 = sld [smem:[#allocation0]]
  $region61: #{tpu_custom_call.1} parent=0
    _
  %s7 = ssub.s32 1, %s5
  %s8 = scalar_select 0, %s7, %s5
  $region1: #{tpu_custom_call.1} parent=0
    #allocation2 [shape = 'u8[131072]{0}', space=vmem, size = 0x20000, scoped, tag = 'input window, operand 0']
    #allocation3 [shape = 's32[2]{0}', space=sflag, size = 0x8, scoped, tag = 'scoped memory for tpu_custom_call.1']
    #allocation4 [shape = 's32[2]{0}', space=sflag, size = 0x8, scoped, tag = 'scoped memory for tpu_custom_call.1']
    #allocation5 [shape = 'u8[1024]{0}', space=vmem, size = 0x400, scoped, tag = 'output window, operand 0']
    %9 = vsyncpa [#allocation3], 0
    %s10 = scalar_lea.sflag [#allocation3], 1
    %11 = vsyncpa %s10, 0
    %12 = vsyncpa [#allocation4], 0
    %s13 = scalar_lea.sflag [#allocation4], 1
    %14 = vsyncpa %s13, 0
    loop: start=0, step=1, limit=6
    $region2: #{tpu_custom_call.1} parent=1 // loop_pre_header
      _
    $region3: #{tpu_custom_call.1} parent=1 // loop_header
      %s16 = sphi 0, %s20
      %p17 = scmp.ge.s32.totalorder %s16, 6
      %s23 = sphi 0, %s35
      %s24 = sphi 0, %s31
      %s25 = sphi 0, %s23
      %s26 = sphi 0, %s24
      %s27 = sphi 0, %s25
      %s28 = sphi 0, %s26
      %s40 = sphi 0, %s42
      %s43 = sphi 0, %s40
      %s44 = sphi 0, %s43
      %s60 = sphi 0, %s44
      %s66 = sphi 0, %s68
      %s69 = sphi 0, %s66
      %s70 = sphi 0, %s69
      %s86 = sphi 0, %s70
      %s92 = sphi 0, %s94
      %s95 = sphi 0, %s92
      %s96 = sphi 0, %s95
      %s112 = sphi 0, %s96
      %s118 = sphi 0, %s120
      %s121 = sphi 0, %s118
      %s122 = sphi 0, %s121
      %s138 = sphi 0, %s122
      %s144 = sphi 0, %s146
      %s147 = sphi 0, %s144
      %s148 = sphi 0, %s147
      %s164 = sphi 0, %s148
    $region4: #{tpu_custom_call.1} parent=1 // loop_header_branch
      %19 = sbr.rel (%p17) target = $region8
    $region5: #{tpu_custom_call.1} parent=1 // loop_body
      %s21 = ssub.s32 %s16, 1
      %s22 = ssub.s32 %s16, 2
      %s29 = sadd.s32 1, %s24
      %p30 = scmp.ge.s32.totalorder %s29, 2
      %s31 = scalar_select %p30, 0, %s29
      %s32 = sadd.s32 1, %s23
      %s33 = scalar_select %p30, %s32, %s23
      %p34 = scmp.ge.s32.totalorder %s33, 2
      %s35 = scalar_select %p34, 0, %s33
      %s36 = ssub.s32 %s24, %s31
      %s37 = ssub.s32 %s23, %s35
      %s38 = sor.u32 %s36, %s37
      %p39 = scmp.eq.s32.totalorder %s38, 0
      %s41 = sadd.s32 %s40, 1
      %s42 = scalar_select %p39, %s40, %s41
      %p45 = pneg %p39
      %p46 = scmp.eq.s32.totalorder %s16, 3
      %p47 = por %p45, %p46
      %p48 = scmp.ne.s32.totalorder %s40, %s43
      %p49 = scmp.eq.s32.totalorder %s16, 0
      %p50 = por %p48, %p49
      %p51 = scmp.ne.s32.totalorder %s40, %s43
      %p52 = scmp.eq.s32.totalorder %s21, 3
      %p53 = por %p51, %p52
      %p54 = scmp.ne.s32.totalorder %s43, %s44
      %p55 = scmp.eq.s32.totalorder %s21, 0
      %p56 = por %p54, %p55
      %p57 = scmp.ne.s32.totalorder %s43, %s44
      %p58 = scmp.eq.s32.totalorder %s22, 3
      %p59 = por %p57, %p58
      %p61 = scmp.ne.s32.totalorder %s44, %s60
      %p62 = scmp.eq.s32.totalorder %s22, 0
      %p63 = por %p61, %p62
      %s64 = ssub.s32 %s23, %s35
      %p65 = scmp.eq.s32.totalorder %s64, 0
      %s67 = sadd.s32 %s66, 1
      %s68 = scalar_select %p65, %s66, %s67
      %p71 = pneg %p65
      %p72 = scmp.eq.s32.totalorder %s16, 3
      %p73 = por %p71, %p72
      %p74 = scmp.ne.s32.totalorder %s66, %s69
      %p75 = scmp.eq.s32.totalorder %s16, 0
      %p76 = por %p74, %p75
      %p77 = scmp.ne.s32.totalorder %s66, %s69
      %p78 = scmp.eq.s32.totalorder %s21, 3
      %p79 = por %p77, %p78
      %p80 = scmp.ne.s32.totalorder %s69, %s70
      %p81 = scmp.eq.s32.totalorder %s21, 0
      %p82 = por %p80, %p81
      %p83 = scmp.ne.s32.totalorder %s69, %s70
      %p84 = scmp.eq.s32.totalorder %s22, 3
      %p85 = por %p83, %p84
      %p87 = scmp.ne.s32.totalorder %s70, %s86
      %p88 = scmp.eq.s32.totalorder %s22, 0
      %p89 = por %p87, %p88
      %s90 = ssub.s32 %s24, %s31
      %p91 = scmp.eq.s32.totalorder %s90, 0
      %s93 = sadd.s32 %s92, 1
      %s94 = scalar_select %p91, %s92, %s93
      %p97 = pneg %p91
      %p98 = scmp.eq.s32.totalorder %s16, 3
      %p99 = por %p97, %p98
      %p100 = scmp.ne.s32.totalorder %s92, %s95
      %p101 = scmp.eq.s32.totalorder %s16, 0
      %p102 = por %p100, %p101
      %p103 = scmp.ne.s32.totalorder %s92, %s95
      %p104 = scmp.eq.s32.totalorder %s21, 3
      %p105 = por %p103, %p104
      %p106 = scmp.ne.s32.totalorder %s95, %s96
      %p107 = scmp.eq.s32.totalorder %s21, 0
      %p108 = por %p106, %p107
      %p109 = scmp.ne.s32.totalorder %s95, %s96
      %p110 = scmp.eq.s32.totalorder %s22, 3
      %p111 = por %p109, %p110
      %p113 = scmp.ne.s32.totalorder %s96, %s112
      %p114 = scmp.eq.s32.totalorder %s22, 0
      %p115 = por %p113, %p114
      %s116 = ssub.s32 %s23, %s35
      %p117 = scmp.eq.s32.totalorder %s116, 0
      %s119 = sadd.s32 %s118, 1
      %s120 = scalar_select %p117, %s118, %s119
      %p123 = pneg %p117
      %p124 = scmp.eq.s32.totalorder %s16, 3
      %p125 = por %p123, %p124
      %p126 = scmp.ne.s32.totalorder %s118, %s121
      %p127 = scmp.eq.s32.totalorder %s16, 0
      %p128 = por %p126, %p127
      %p129 = scmp.ne.s32.totalorder %s118, %s121
      %p130 = scmp.eq.s32.totalorder %s21, 3
      %p131 = por %p129, %p130
      %p132 = scmp.ne.s32.totalorder %s121, %s122
      %p133 = scmp.eq.s32.totalorder %s21, 0
      %p134 = por %p132, %p133
      %p135 = scmp.ne.s32.totalorder %s121, %s122
      %p136 = scmp.eq.s32.totalorder %s22, 3
      %p137 = por %p135, %p136
      %p139 = scmp.ne.s32.totalorder %s122, %s138
      %p140 = scmp.eq.s32.totalorder %s22, 0
      %p141 = por %p139, %p140
      %s142 = ssub.s32 %s23, %s35
      %p143 = scmp.eq.s32.totalorder %s142, 0
      %s145 = sadd.s32 %s144, 1
      %s146 = scalar_select %p143, %s144, %s145
      %p149 = pneg %p143
      %p150 = scmp.eq.s32.totalorder %s16, 3
      %p151 = por %p149, %p150
      %p152 = scmp.ne.s32.totalorder %s144, %s147
      %p153 = scmp.eq.s32.totalorder %s16, 0
      %p154 = por %p152, %p153
      %p155 = scmp.ne.s32.totalorder %s144, %s147
      %p156 = scmp.eq.s32.totalorder %s21, 3
      %p157 = por %p155, %p156
      %p158 = scmp.ne.s32.totalorder %s147, %s148
      %p159 = scmp.eq.s32.totalorder %s21, 0
      %p160 = por %p158, %p159
      %p161 = scmp.ne.s32.totalorder %s147, %s148
      %p162 = scmp.eq.s32.totalorder %s22, 3
      %p163 = por %p161, %p162
      %p165 = scmp.ne.s32.totalorder %s148, %s164
      %p166 = scmp.eq.s32.totalorder %s22, 0
      %p167 = por %p165, %p166
      %p168 = scmp.le.s32.totalorder 1, %s16
      %p169 = scmp.lt.s32.totalorder %s16, 5
      %p170 = pnand %p168, %p169
      %p171 = pneg %p170
      // Predicated region
      $region9: #{tpu_custom_call.1} parent=5 // pred_check
        _
      $region10: #{tpu_custom_call.1} parent=5 // pred_check_branch
        %173 = sbr.rel (%p170) target = $region12
      $region11: #{tpu_custom_call.1} parent=5 // pred_region
        %s174 = ssub.s32 %s16, 1
      $region12: #{tpu_custom_call.1} parent=5 // pred_fallthru
        _
      %p175 = scmp.lt.s32.totalorder %s16, 4
      // Predicated region
      $region13: #{tpu_custom_call.1} parent=5 // pred_check
        %p176 = pneg %p175
      $region14: #{tpu_custom_call.1} parent=5 // pred_check_branch
        %178 = sbr.rel (%p176) target = $region16
      $region15: #{tpu_custom_call.1} parent=5 // pred_region
        // Predicated region
        $region17: #{tpu_custom_call.1} parent=15 // pred_check
          %p179 = pneg %p50
        $region18: #{tpu_custom_call.1} parent=15 // pred_check_branch
          %181 = sbr.rel (%p179) target = $region20
        $region19: #{tpu_custom_call.1} parent=15 // pred_region
          %s182 = sand.u32 %s40, 1
          %s183 = scalar_lea.sflag [#allocation3], %s182
          %s184 = sand.u32 %s40, 1
          %s185 = smul.addr %s184, 128
          %s186 = scalar_lea.vmem [#allocation2], %s185
          %s187 = smul.u32 16, %s24
          %189 = vsyncadd %s183, 0
          %s190 = smul.addr %s187, 2
          %s191 = sadd.s32 %s23, %s190
          %s192 = smul.addr %s191, 8
          %s193 = scalar_lea.hbm %s0, %s192
          %s194 = sshll.u32 %s193, 4
          %s195 = int_to_ptr.hbm [resolvable:$true] %s194
          %s196 = sshll.u32 %s186, 4
          %s197 = int_to_ptr.vmem [resolvable:$true] %s196
          %202 = dma.hbm_to_vmem [thread:$0]  %s195, 2048, %s197, %s183, 256, 128, 8
        $region20: #{tpu_custom_call.1} parent=15 // pred_fallthru
          _
        // Predicated region
        $region21: #{tpu_custom_call.1} parent=15 // pred_check
          %p203 = pneg %p76
        $region22: #{tpu_custom_call.1} parent=15 // pred_check_branch
          %205 = sbr.rel (%p203) target = $region24
        $region23: #{tpu_custom_call.1} parent=15 // pred_region
          %p206 = scmp.lt.s32.totalorder %s23, 1
          %s207 = scalar_select %p206, %s23, 1
          %s208 = smul.addr %s207, 8
          %s209 = scalar_lea.vmem %s1, %s208
        $region24: #{tpu_custom_call.1} parent=15 // pred_fallthru
          _
        // Predicated region
        $region25: #{tpu_custom_call.1} parent=15 // pred_check
          %p210 = pneg %p102
        $region26: #{tpu_custom_call.1} parent=15 // pred_check_branch
          %212 = sbr.rel (%p210) target = $region28
        $region27: #{tpu_custom_call.1} parent=15 // pred_region
          %s213 = smul.u32 16, %s24
          %p214 = scmp.lt.s32.totalorder %s213, 31
          %s215 = scalar_select %p214, %s213, 31
          %s216 = smul.addr %s215, 8
          %s217 = scalar_lea.vmem %s2, %s216
          %s218 = smul.u32 16, %s24
        $region28: #{tpu_custom_call.1} parent=15 // pred_fallthru
          _
        // Predicated region
        $region29: #{tpu_custom_call.1} parent=15 // pred_check
          %p219 = pneg %p128
        $region30: #{tpu_custom_call.1} parent=15 // pred_check_branch
          %221 = sbr.rel (%p219) target = $region32
        $region31: #{tpu_custom_call.1} parent=15 // pred_region
          %p222 = scmp.lt.s32.totalorder %s23, 1
          %s223 = scalar_select %p222, %s23, 1
          %s224 = scalar_lea.vmem %s3, %s223
        $region32: #{tpu_custom_call.1} parent=15 // pred_fallthru
          _
      $region16: #{tpu_custom_call.1} parent=5 // pred_fallthru
        _
      %p225 = scmp.le.s32.totalorder 1, %s16
      %p226 = scmp.lt.s32.totalorder %s16, 5
      %p227 = pnand %p225, %p226
      %p228 = pneg %p227
      // Predicated region
      $region33: #{tpu_custom_call.1} parent=5 // pred_check
        _
      $region34: #{tpu_custom_call.1} parent=5 // pred_check_branch
        %230 = sbr.rel (%p227) target = $region36
      $region35: #{tpu_custom_call.1} parent=5 // pred_region
        %s231 = ssub.s32 %s16, 1
        %s232 = sand.u32 %s43, 1
        %s233 = scalar_lea.sflag [#allocation3], %s232
        %s234 = sand.u32 %s43, 1
        %s235 = smul.addr %s234, 128
        %s236 = scalar_lea.vmem [#allocation2], %s235
        // Predicated region
        $region37: #{tpu_custom_call.1} parent=35 // pred_check
          %p237 = pneg %p56
        $region38: #{tpu_custom_call.1} parent=35 // pred_check_branch
          %239 = sbr.rel (%p237) target = $region40
        $region39: #{tpu_custom_call.1} parent=35 // pred_region
          %241 = dma.done %s233, 2048
        $region40: #{tpu_custom_call.1} parent=35 // pred_fallthru
          _
        %s242 = sand.u32 %s43, 1
        %s243 = scalar_lea.sflag [#allocation3], %s242
        %s244 = sand.u32 %s43, 1
        %s245 = smul.addr %s244, 128
        %s246 = scalar_lea.vmem [#allocation2], %s245
        %p247 = pneg %p56
        %p248 = pneg %p53
        %p249 = scmp.lt.s32.totalorder %s25, 1
        %s250 = scalar_select %p249, %s25, 1
        %s251 = smul.addr %s250, 8
        %s252 = scalar_lea.vmem %s1, %s251
        %p253 = pneg %p82
        %p254 = pneg %p79
        %s255 = smul.u32 16, %s26
        %p256 = scmp.lt.s32.totalorder %s255, 31
        %s257 = scalar_select %p256, %s255, 31
        %s258 = smul.addr %s257, 8
        %s259 = scalar_lea.vmem %s2, %s258
        %p260 = pneg %p108
        %p261 = pneg %p105
        %p262 = scmp.lt.s32.totalorder %s25, 1
        %s263 = scalar_select %p262, %s25, 1
        %s264 = scalar_lea.vmem %s3, %s263
        %p265 = pneg %p134
        %p266 = pneg %p131
        %p267 = pneg %p160
        %p268 = pneg %p157
        %s269 = sand.u32 %s147, 1
        %s270 = scalar_lea.sflag [#allocation4], %s269
        %s271 = sand.u32 %s147, 1
        %s272 = scalar_lea.vmem [#allocation5], %s271
        %s273 = smul.u32 16, %s26
        %p274 = scmp.lt.s32.totalorder %s25, 1
        %s275 = scalar_select %p274, %s25, 1
        %s276 = smul.addr %s275, 8
        %s277 = scalar_lea.vmem %s1, %s276
        %s278 = smul.u32 16, %s26
        %p279 = scmp.lt.s32.totalorder %s278, 31
        %s280 = scalar_select %p279, %s278, 31
        %s281 = smul.addr %s280, 8
        %s282 = scalar_lea.vmem %s2, %s281
        %s283 = smul.u32 16, %s26
        %p284 = scmp.lt.s32.totalorder %s25, 1
        %s285 = scalar_select %p284, %s25, 1
        %s286 = scalar_lea.vmem %s3, %s285
        %p287 = scmp.eq.s32.totalorder %s26, 0
        // Predicated region
        $region41: #{tpu_custom_call.1} parent=35 // pred_check
          %p288 = pneg %p287
        $region42: #{tpu_custom_call.1} parent=35 // pred_check_branch
          %290 = sbr.rel (%p288) target = $region44
        $region43: #{tpu_custom_call.1} parent=35 // pred_region
          %291 = vst [vmem:[%s272] sm:$0x1] 0.0
        $region44: #{tpu_custom_call.1} parent=35 // pred_fallthru
          _
        %v292 = vld [vmem:[%s282] sm:$0xff]
        %v293 = vld [vmem:[%s282 + $0x8] sm:$0xff]
        %v294 = vld [vmem:[%s282 + $0x10] sm:$0xff]
        %v295 = vld [vmem:[%s282 + $0x18] sm:$0xff]
        %v296 = vld [vmem:[%s282 + $0x20] sm:$0xff]
        %v297 = vld [vmem:[%s282 + $0x28] sm:$0xff]
        %v298 = vld [vmem:[%s282 + $0x30] sm:$0xff]
        %v299 = vld [vmem:[%s282 + $0x38] sm:$0xff]
        %v300 = vld [vmem:[%s282 + $0x40] sm:$0xff]
        %v301 = vld [vmem:[%s282 + $0x48] sm:$0xff]
        %v302 = vld [vmem:[%s282 + $0x50] sm:$0xff]
        %v303 = vld [vmem:[%s282 + $0x58] sm:$0xff]
        %v304 = vld [vmem:[%s282 + $0x60] sm:$0xff]
        %v305 = vld [vmem:[%s282 + $0x68] sm:$0xff]
        %v306 = vld [vmem:[%s282 + $0x70] sm:$0xff]
        %v307 = vld [vmem:[%s282 + $0x78] sm:$0xff]
        %v308 = vld [vmem:[%s277] sm:$0xff]
        %vm309 = vcmask 64512
        %v311 = vsel %vm309, %v292, 0
        %v314 = vsel %vm309, %v293, 0
        %v317 = vsel %vm309, %v294, 0
        %v320 = vsel %vm309, %v295, 0
        %v323 = vsel %vm309, %v296, 0
        %v326 = vsel %vm309, %v297, 0
        %v329 = vsel %vm309, %v298, 0
        %v332 = vsel %vm309, %v299, 0
        %v335 = vsel %vm309, %v300, 0
        %v338 = vsel %vm309, %v301, 0
        %v341 = vsel %vm309, %v302, 0
        %v344 = vsel %vm309, %v303, 0
        %v347 = vsel %vm309, %v304, 0
        %v350 = vsel %vm309, %v305, 0
        %v353 = vsel %vm309, %v306, 0
        %v356 = vsel %vm309, %v307, 0
        %358 = vmatpush.msra.mxu0 0.0
        %359 = vmatpush.msra.mxu0 0.0
        %360 = vmatpush.msra.mxu0 0.0
        %361 = vmatpush.msra.mxu0 0.0
        %362 = vmatpush.msra.mxu0 0.0
        %363 = vmatpush.msra.mxu0 0.0
        %364 = vmatpush.msra.mxu0 0.0
        %365 = vmatpush.msra.mxu0 0.0
        %366 = vmatpush.msra.mxu0 0.0
        %367 = vmatpush.msra.mxu0 0.0
        %368 = vmatpush.msra.mxu0 0.0
        %369 = vmatpush.msra.mxu0 0.0
        %370 = vmatpush.msra.mxu0 0.0
        %371 = vmatpush.msra.mxu0 0.0
        %372 = vmatpush.msra.mxu0 0.0
        %373 = vmatpush.msra.mxu0 %v308
        %374 = vmatmul.f32.gmra.mxu0 %v311
        %v375 = vpop.f32.mrf.mxu0
        %v376 = vadd.f32 0.0, %v375
        %377 = vmatmul.f32.gmra.mxu0 %v314
        %v378 = vpop.f32.mrf.mxu0
        %v379 = vadd.f32 0.0, %v378
        %380 = vmatmul.f32.gmra.mxu0 %v317
        %v381 = vpop.f32.mrf.mxu0
        %v382 = vadd.f32 0.0, %v381
        %383 = vmatmul.f32.gmra.mxu0 %v320
        %v384 = vpop.f32.mrf.mxu0
        %v385 = vadd.f32 0.0, %v384
        %386 = vmatmul.f32.gmra.mxu0 %v323
        %v387 = vpop.f32.mrf.mxu0
        %v388 = vadd.f32 0.0, %v387
        %389 = vmatmul.f32.gmra.mxu0 %v326
        %v390 = vpop.f32.mrf.mxu0
        %v391 = vadd.f32 0.0, %v390
        %392 = vmatmul.f32.gmra.mxu0 %v329
        %v393 = vpop.f32.mrf.mxu0
        %v394 = vadd.f32 0.0, %v393
        %395 = vmatmul.f32.gmra.mxu0 %v332
        %v396 = vpop.f32.mrf.mxu0
        %v397 = vadd.f32 0.0, %v396
        %398 = vmatmul.f32.gmra.mxu0 %v335
        %v399 = vpop.f32.mrf.mxu0
        %v400 = vadd.f32 0.0, %v399
        %401 = vmatmul.f32.gmra.mxu0 %v338
        %v402 = vpop.f32.mrf.mxu0
        %v403 = vadd.f32 0.0, %v402
        %404 = vmatmul.f32.gmra.mxu0 %v341
        %v405 = vpop.f32.mrf.mxu0
        %v406 = vadd.f32 0.0, %v405
        %407 = vmatmul.f32.gmra.mxu0 %v344
        %v408 = vpop.f32.mrf.mxu0
        %v409 = vadd.f32 0.0, %v408
        %410 = vmatmul.f32.gmra.mxu0 %v347
        %v411 = vpop.f32.mrf.mxu0
        %v412 = vadd.f32 0.0, %v411
        %413 = vmatmul.f32.gmra.mxu0 %v350
        %v414 = vpop.f32.mrf.mxu0
        %v415 = vadd.f32 0.0, %v414
        %416 = vmatmul.f32.gmra.mxu0 %v353
        %v417 = vpop.f32.mrf.mxu0
        %v418 = vadd.f32 0.0, %v417
        %419 = vmatmul.f32.gmra.mxu0 %v356
        %v420 = vpop.f32.mrf.mxu0
        %v421 = vadd.f32 0.0, %v420
        %422 = vdwg.mxu0
        %v423 = vld [vmem:[%s236] sm:$0xff]
        %v424 = vld [vmem:[%s236 + $0x8] sm:$0xff]
        %v425 = vld [vmem:[%s236 + $0x10] sm:$0xff]
        %v426 = vld [vmem:[%s236 + $0x18] sm:$0xff]
        %v427 = vld [vmem:[%s236 + $0x20] sm:$0xff]
        %v428 = vld [vmem:[%s236 + $0x28] sm:$0xff]
        %v429 = vld [vmem:[%s236 + $0x30] sm:$0xff]
        %v430 = vld [vmem:[%s236 + $0x38] sm:$0xff]
        %v431 = vld [vmem:[%s236 + $0x40] sm:$0xff]
        %v432 = vld [vmem:[%s236 + $0x48] sm:$0xff]
        %v433 = vld [vmem:[%s236 + $0x50] sm:$0xff]
        %v434 = vld [vmem:[%s236 + $0x58] sm:$0xff]
        %v435 = vld [vmem:[%s236 + $0x60] sm:$0xff]
        %v436 = vld [vmem:[%s236 + $0x68] sm:$0xff]
        %v437 = vld [vmem:[%s236 + $0x70] sm:$0xff]
        %v438 = vld [vmem:[%s236 + $0x78] sm:$0xff]
        %v439 = vadd.f32 %v423, %v376
        %v440 = vadd.f32 %v424, %v379
        %v441 = vadd.f32 %v425, %v382
        %v442 = vadd.f32 %v426, %v385
        %v443 = vadd.f32 %v427, %v388
        %v444 = vadd.f32 %v428, %v391
        %v445 = vadd.f32 %v429, %v394
        %v446 = vadd.f32 %v430, %v397
        %v447 = vadd.f32 %v431, %v400
        %v448 = vadd.f32 %v432, %v403
        %v449 = vadd.f32 %v433, %v406
        %v450 = vadd.f32 %v434, %v409
        %v451 = vadd.f32 %v435, %v412
        %v452 = vadd.f32 %v436, %v415
        %v453 = vadd.f32 %v437, %v418
        %v454 = vadd.f32 %v438, %v421
        %v455 = vld [vmem:[%s272] sm:$0x1]
        %v456 = vmul.f32 %v439, %v439
        %v457 = vmul.f32 %v440, %v440
        %v458 = vmul.f32 %v441, %v441
        %v459 = vmul.f32 %v442, %v442
        %v460 = vmul.f32 %v443, %v443
        %v461 = vmul.f32 %v444, %v444
        %v462 = vmul.f32 %v445, %v445
        %v463 = vmul.f32 %v446, %v446
        %v464 = vmul.f32 %v447, %v447
        %v465 = vmul.f32 %v448, %v448
        %v466 = vmul.f32 %v449, %v449
        %v467 = vmul.f32 %v450, %v450
        %v468 = vmul.f32 %v451, %v451
        %v469 = vmul.f32 %v452, %v452
        %v470 = vmul.f32 %v453, %v453
        %v471 = vmul.f32 %v454, %v454
        %v472 = vadd.f32 %v456, %v457
        %v473 = vadd.f32 %v472, %v458
        %v474 = vadd.f32 %v473, %v459
        %v475 = vadd.f32 %v474, %v460
        %v476 = vadd.f32 %v475, %v461
        %v477 = vadd.f32 %v476, %v462
        %v478 = vadd.f32 %v477, %v463
        %v479 = vadd.f32 %v478, %v464
        %v480 = vadd.f32 %v479, %v465
        %v481 = vadd.f32 %v480, %v466
        %v482 = vadd.f32 %v481, %v467
        %v483 = vadd.f32 %v482, %v468
        %v484 = vadd.f32 %v483, %v469
        %v485 = vadd.f32 %v484, %v470
        %v486 = vadd.f32 %v485, %v471
        %v487 = vrot.slane %v486, 4
        %v488 = vadd.f32 %v486, %v487
        %v489 = vrot.slane %v488, 2
        %v490 = vadd.f32 %v488, %v489
        %v491 = vrot.slane %v490, 1
        %v492 = vadd.f32 %v490, %v491
        %v493 = vadd.f32 %v455, %v492
        %494 = vst [vmem:[%s272] sm:$0x1] %v493
        %p495 = scmp.eq.s32.totalorder %s26, 1
        // Predicated region
        $region45: #{tpu_custom_call.1} parent=35 // pred_check
          %p496 = pneg %p495
        $region46: #{tpu_custom_call.1} parent=35 // pred_check_branch
          %498 = sbr.rel (%p496) target = $region48
        $region47: #{tpu_custom_call.1} parent=35 // pred_region
          %v499 = vld [vmem:[%s272] sm:$0x1]
          %v500 = vld [vmem:[%s286] sm:$0x1]
          %v501 = vrsqrt.pop %v499
          %v502 = vmul.f32 %v501, %v499
          %v503 = vmul.f32 %v502, %v501
          %v504 = vmul.f32 0.5, %v503
          %v505 = vsub.f32 1.5, %v504
          %v506 = vmul.f32 %v501, %v505
          %vm507 = vweird.f32 %v499
          %vm508 = vweird.f32 %v501
          %vm509 = vmor %vm507, %vm508
          %v510 = vsel %vm509, %v501, %v506
          %v511 = vmul.f32 %v500, %v510
          %512 = vst [vmem:[%s272] sm:$0x1] %v511
        $region48: #{tpu_custom_call.1} parent=35 // pred_fallthru
          _
        %s513 = sand.u32 %s147, 1
        %s514 = scalar_lea.sflag [#allocation4], %s513
        %s515 = sand.u32 %s147, 1
        %s516 = scalar_lea.vmem [#allocation5], %s515
        // Predicated region
        $region49: #{tpu_custom_call.1} parent=35 // pred_check
          %p517 = pneg %p157
        $region50: #{tpu_custom_call.1} parent=35 // pred_check_branch
          %519 = sbr.rel (%p517) target = $region52
        $region51: #{tpu_custom_call.1} parent=35 // pred_region
          %521 = vsyncadd %s514, 0
          %s522 = scalar_lea.hbm %s4, %s25
          %s524 = sshll.u32 %s516, 4
          %s525 = int_to_ptr.vmem [resolvable:$true] %s524
          %s526 = sshll.u32 %s522, 4
          %s527 = int_to_ptr.hbm [resolvable:$true] %s526
          %529 = dma.vmem_to_hbm [thread:$0]  %s525, 16, %s527, %s514
        $region52: #{tpu_custom_call.1} parent=35 // pred_fallthru
          _
      $region36: #{tpu_custom_call.1} parent=5 // pred_fallthru
        _
      %p530 = scmp.le.s32.totalorder 2, %s16
      // Predicated region
      $region53: #{tpu_custom_call.1} parent=5 // pred_check
        %p531 = pneg %p530
      $region54: #{tpu_custom_call.1} parent=5 // pred_check_branch
        %533 = sbr.rel (%p531) target = $region56
      $region55: #{tpu_custom_call.1} parent=5 // pred_region
        %s534 = ssub.s32 %s16, 2
        // Predicated region
        $region57: #{tpu_custom_call.1} parent=55 // pred_check
          %p535 = pneg %p163
        $region58: #{tpu_custom_call.1} parent=55 // pred_check_branch
          %537 = sbr.rel (%p535) target = $region60
        $region59: #{tpu_custom_call.1} parent=55 // pred_region
          %s538 = sand.u32 %s148, 1
          %s539 = scalar_lea.sflag [#allocation4], %s538
          %s540 = sand.u32 %s148, 1
          %s541 = scalar_lea.vmem [#allocation5], %s540
          %543 = dma.done %s539, 16
        $region60: #{tpu_custom_call.1} parent=55 // pred_fallthru
          _
      $region56: #{tpu_custom_call.1} parent=5 // pred_fallthru
        _
    $region6: #{tpu_custom_call.1} parent=1 // loop_footer
      %s20 = sadd.s32 1, %s16
    $region7: #{tpu_custom_call.1} parent=1 // loop_footer_branch
      %15 = sbr.rel target = $region3
    $region8: #{tpu_custom_call.1} parent=1 // loop_exit
      _
    %544 = vsyncpa [#allocation3], 1
    %s545 = scalar_lea.sflag [#allocation3], 1
    %546 = vsyncpa %s545, 1
    %547 = vsyncpa [#allocation4], 1
    %s548 = scalar_lea.sflag [#allocation4], 1
    %549 = vsyncpa %s548, 1

</llo_original>
